<compile_context>
chip_gen: v7x
topology: tpu7x:2x2x1
jax: 0.10.0
libtpu: 0.0.40
codegen_flags: <defaults>
</compile_context>

<pallas_src>
import functools

import jax
import jax.numpy as jnp
from jax.experimental import pallas as pl
from jax.experimental.pallas import tpu as pltpu


def _linear_kernel(x_ref, w_ref, b_ref, o_ref):
    # x_ref: (tm, k_pad) bf16   w_ref: (k_pad, out) bf16   b_ref: (1, out) f32
    acc = jnp.dot(x_ref[...], w_ref[...], preferred_element_type=jnp.float32)
    o_ref[...] = (acc + b_ref[...]).astype(o_ref.dtype)


@functools.partial(
    jax.jit, static_argnames=("tile_m", "min_pallas_rows", "compute_dtype")
)
def linear_pallas(x, w, b, *, tile_m=512, min_pallas_rows=256,
                  compute_dtype=jnp.bfloat16):
    """h = x @ w[:in_features] + b.

    x : (n, in_features)  node features (f32).
    w : (k_pad, out_features)  weight, zero-padded along K to a lane multiple.
    b : (out_features,)  bias (f32).
    """
    n, k_in = x.shape
    k_pad, n_out = w.shape
    out_dtype = x.dtype

    # Tiny graphs: a single fused XLA matmul beats pallas_call launch +
    # pipeline-prologue cost (a few microseconds) at these sizes.
    if n < min_pallas_rows:
        h = jnp.dot(x, w[:k_in].astype(x.dtype),
                    preferred_element_type=jnp.float32) + b
        return h.astype(out_dtype)

    # Cast the dominant-traffic operand (x) to bf16 and zero-pad K 117 -> 128
    # in the same fused elementwise pass (zero-padded K rows of w keep the
    # math exact).
    x_c = x.astype(compute_dtype)
    if k_pad != k_in:
        x_c = jnp.pad(x_c, ((0, 0), (0, k_pad - k_in)))
    w_c = w.astype(compute_dtype)
    b2 = b.reshape(1, n_out).astype(jnp.float32)

    # Cap the tile so the row grid keeps >=2 steps when possible (v7x megacore
    # sharding via dimension_semantics), but never below 256 rows so per-step
    # overhead stays amortized. Always a multiple of 8 (sublane constraint).
    tm = min(tile_m, max(256, 8 * pl.cdiv(pl.cdiv(n, 2), 8)))
    grid_m = pl.cdiv(n, tm)  # ragged last block: OOB rows dropped on store

    cost = pl.CostEstimate(
        flops=2 * n * k_pad * n_out,
        transcendentals=0,
        bytes_accessed=(x_c.size * x_c.dtype.itemsize
                        + w_c.size * w_c.dtype.itemsize
                        + b2.size * 4
                        + n * n_out * jnp.dtype(out_dtype).itemsize),
    )

    # VMEM footprint per step (tm=512): x tile 512*128*2 B = 128 KiB, out tile
    # 512*32*4 B = 64 KiB, weight 8 KiB -> far under the default scoped limit
    # on every generation, so no explicit vmem_limit_bytes needed.
    out = pl.pallas_call(
        _linear_kernel,
        out_shape=jax.ShapeDtypeStruct((n, n_out), out_dtype),
        grid_spec=pltpu.PrefetchScalarGridSpec(
            num_scalar_prefetch=0,
            grid=(grid_m,),
            in_specs=[
                pl.BlockSpec((tm, k_pad), lambda i: (i, 0)),
                pl.BlockSpec((k_pad, n_out), lambda i: (0, 0)),
                pl.BlockSpec((1, n_out), lambda i: (0, 0)),
            ],
            out_specs=pl.BlockSpec((tm, n_out), lambda i: (i, 0)),
        ),
        compiler_params=pltpu.CompilerParams(
            dimension_semantics=("parallel",),
        ),
        cost_estimate=cost,
    )(x_c, w_c, b2)
    return out


class InputLayerPallas:
    """JAX/Pallas port of hpnotiq InputLayer.

    The "graph" is represented as a dict:
      {'n1': {'h0': [N1, in_features]}, 'n2': {'num_nodes': int}, ...}
    forward() returns a dict of per-ntype 'h' features:
      n1            -> Linear(h0)   (Pallas matmul kernel for non-tiny graphs)
      n2..max_level -> zeros([num_nodes, out_features])
    """

    def __init__(self, in_features=117, out_features=32, max_level=4,
                 key=None, k_align=128):
        self.in_features = in_features
        self.out_features = out_features
        self.max_level = max_level
        if key is None:
            key = jax.random.PRNGKey(0)
        kw, kb = jax.random.split(key)
        # Deterministic init mirroring torch.nn.Linear (uniform +-1/sqrt(fan_in)).
        bound = 1.0 / (in_features ** 0.5)
        w = jax.random.uniform(
            kw, (in_features, out_features), jnp.float32, -bound, bound)
        # Stored transposed ([in, out]) and zero-padded along K to a lane
        # multiple so the kernel gets an aligned, fully-utilized MXU K dim.
        self.k_pad = ((in_features + k_align - 1) // k_align) * k_align
        self.weight = jnp.zeros(
            (self.k_pad, out_features), jnp.float32).at[:in_features].set(w)
        self.bias = jax.random.uniform(
            kb, (out_features,), jnp.float32, -bound, bound)

    def forward(self, g):
        out = {}
        # ntype 'n1': h = Linear(h0)  -- Pallas kernel hot path.
        out["n1"] = {"h": linear_pallas(g["n1"]["h0"], self.weight, self.bias)}
        # ntypes n2..max_level: h = zeros(num_nodes, out_features).
        # (Pure constant fill; left to XLA, no compute to put in a kernel.)
        for idx in range(2, self.max_level + 1):
            nt = "n%s" % idx
            num_nodes = g[nt]["num_nodes"]
            out[nt] = {"h": jnp.zeros((num_nodes, self.out_features),
                                      jnp.float32)}
        return out


if __name__ == "__main__":
    key = jax.random.PRNGKey(0)
    k_x, k_params, k_tiny = jax.random.split(key, 3)

    in_features, out_features, max_level = 117, 32, 4
    # Not a multiple of the row tile -> exercises the ragged last grid block;
    # large enough to take the Pallas path (>= 2 grid steps).
    n1_nodes = 613
    g = {
        "n1": {"h0": jax.random.normal(k_x, (n1_nodes, in_features),
                                       jnp.float32)},
        "n2": {"num_nodes": 6},
        "n3": {"num_nodes": 5},
        "n4": {"num_nodes": 3},
    }

    layer = InputLayerPallas(in_features, out_features, max_level, key=k_params)
    out = layer.forward(g)
    jax.block_until_ready(out)

    # Reference for the Pallas path (bf16 operands, f32 accumulation).
    x = g["n1"]["h0"]
    w_used = layer.weight[:in_features]
    ref = (jnp.dot(x.astype(jnp.bfloat16).astype(jnp.float32),
                   w_used.astype(jnp.bfloat16).astype(jnp.float32))
           + layer.bias)
    assert out["n1"]["h"].shape == (n1_nodes, out_features)
    assert out["n1"]["h"].dtype == jnp.float32
    assert jnp.allclose(out["n1"]["h"], ref, atol=2e-2, rtol=2e-2)

    for idx in range(2, max_level + 1):
        nt = "n%s" % idx
        assert out[nt]["h"].shape == (g[nt]["num_nodes"], out_features)
        assert not jnp.any(out[nt]["h"])

    # Tiny-graph fast path (bypasses pallas_call): exact f32 check.
    x_tiny = jax.random.normal(k_tiny, (10, in_features), jnp.float32)
    h_tiny = linear_pallas(x_tiny, layer.weight, layer.bias)
    ref_tiny = x_tiny @ w_used + layer.bias
    assert h_tiny.shape == (10, out_features)
    assert jnp.allclose(h_tiny, ref_tiny, atol=1e-5, rtol=1e-5)

    print("KERNEL_OK")
</pallas_src>

<mosaic_0001>
module attributes {stable_mosaic.version = 11 : i64} {
  func.func @_linear_kernel(%arg0: i32, %arg1: memref<312x128xbf16, #tpu.memory_space<vmem>>, %arg2: memref<128x32xbf16, #tpu.memory_space<vmem>>, %arg3: memref<1x32xf32, #tpu.memory_space<vmem>>, %arg4: memref<312x32xf32, #tpu.memory_space<vmem>>) attributes {dimension_semantics = [#tpu.dimension_semantics<parallel>], iteration_bounds = array<i64: 2>, scalar_prefetch = 0 : i64, scratch_operands = 0 : i64, tpu.core_type = #tpu.core_type<tc>, window_params = [{transform_indices = @transform_0, window_bounds = array<i64: 312, 128>}, {pipeline_mode = #tpu.pipeline_mode<synchronous>, transform_indices = @transform_1, window_bounds = array<i64: 128, 32>}, {pipeline_mode = #tpu.pipeline_mode<synchronous>, transform_indices = @transform_2, window_bounds = array<i64: 1, 32>}, {transform_indices = @transform_3, window_bounds = array<i64: 312, 32>}]} {
    %c0 = arith.constant 0 : index
    %c0_0 = arith.constant 0 : index
    %0 = vector.load %arg1[%c0, %c0_0] : memref<312x128xbf16, #tpu.memory_space<vmem>>, vector<312x128xbf16>
    %c0_1 = arith.constant 0 : index
    %c0_2 = arith.constant 0 : index
    %1 = vector.load %arg2[%c0_1, %c0_2] : memref<128x32xbf16, #tpu.memory_space<vmem>>, vector<128x32xbf16>
    %cst = arith.constant dense<0.000000e+00> : vector<312x32xf32>
    %2 = tpu.matmul %0, %1, %cst {dimension_numbers = #tpu.dot_dimension_numbers<[1], [0], [0], [1], [0, 0, 1, 1], [], []>} : vector<312x128xbf16>, vector<128x32xbf16>, vector<312x32xf32> -> vector<312x32xf32>
    %c0_3 = arith.constant 0 : index
    %c0_4 = arith.constant 0 : index
    %3 = vector.load %arg3[%c0_3, %c0_4] : memref<1x32xf32, #tpu.memory_space<vmem>>, vector<1x32xf32>
    %4 = vector.broadcast %3 : vector<1x32xf32> to vector<312x32xf32>
    %5 = arith.addf %2, %4 : vector<312x32xf32>
    %c0_5 = arith.constant 0 : index
    %c0_6 = arith.constant 0 : index
    %6 = vector.load %arg4[%c0_5, %c0_6] : memref<312x32xf32, #tpu.memory_space<vmem>>, vector<312x32xf32>
    tpu.vector_store %arg4[%c0_5, %c0_6], %5 {strides = array<i32>} : memref<312x32xf32, #tpu.memory_space<vmem>>, vector<312x32xf32>,
    return
  }
  func.func @transform_0(%arg0: i32) -> (i32, i32) {
    %c0_i32 = arith.constant 0 : i32
    %c0_i32_0 = arith.constant 0 : i32
    return %arg0, %c0_i32 : i32, i32
  }
  func.func @transform_1(%arg0: i32) -> (i32, i32) {
    %c0_i32 = arith.constant 0 : i32
    %c0_i32_0 = arith.constant 0 : i32
    %c0_i32_1 = arith.constant 0 : i32
    return %c0_i32, %c0_i32_0 : i32, i32
  }
  func.func @transform_2(%arg0: i32) -> (i32, i32) {
    %c0_i32 = arith.constant 0 : i32
    %c0_i32_0 = arith.constant 0 : i32
    %c0_i32_1 = arith.constant 0 : i32
    return %c0_i32, %c0_i32_0 : i32, i32
  }
  func.func @transform_3(%arg0: i32) -> (i32, i32) {
    %c0_i32 = arith.constant 0 : i32
    %c0_i32_0 = arith.constant 0 : i32
    return %arg0, %c0_i32 : i32, i32
  }
}

</mosaic_0001>

<llo_original>
// kernel: linear_pallas.1
$region0: #{linear_pallas.1}
  #allocation0 [shape = 'u32[]', space=smem, size = 0x4, offset = 0x4, fixed_abs, tag = 'smem constant byte address 0x4 - core index']
  #allocation1 [shape = 'u32[144,128]{1,0:T(1,128)}', space=vmem, size = 0x12000, scoped, tag = 'internal scratch']
  %s0 = inlined_call_operand.vmem [shape: bf16[613,128], index: 0, kind: input, shape index: {}]
  %s1 = inlined_call_operand.vmem [shape: bf16[128,32], index: 1, kind: input, shape index: {}]
  %s2 = inlined_call_operand.vmem [shape: f32[1,32], index: 2, kind: input, shape index: {}]
  %s3 = inlined_call_operand.vmem [shape: f32[613,32], index: 3, kind: output, shape index: {}]
  %s4 = sld [smem:[#allocation0]]
  $region93: #{linear_pallas.1} parent=0
    _
  %s6 = ssub.s32 1, %s4
  %s7 = scalar_select 0, %s6, %s4
  $region1: #{linear_pallas.1} parent=0
    #allocation2 [shape = 'u8[319488]{0}', space=vmem, size = 0x4e000, scoped, tag = 'output window, operand 0']
    loop: start=0, step=1, limit=4
    $region2: #{linear_pallas.1} parent=1 // loop_pre_header
      _
    $region3: #{linear_pallas.1} parent=1 // loop_header
      %s9 = sphi 0, %s13
      %p10 = scmp.ge.s32.totalorder %s9, 4
      %s19 = sphi 0, %s21
      %s22 = sphi 0, %s19
      %s23 = sphi 0, %s22
      %s39 = sphi 0, %s23
      %s43 = sphi 0, %s43
      %s45 = sphi 0, %s43
      %s46 = sphi 0, %s45
      %s60 = sphi 0, %s46
      %s64 = sphi 0, %s64
      %s66 = sphi 0, %s64
      %s67 = sphi 0, %s66
      %s81 = sphi 0, %s67
      %s87 = sphi 0, %s89
      %s90 = sphi 0, %s87
      %s91 = sphi 0, %s90
      %s107 = sphi 0, %s91
    $region4: #{linear_pallas.1} parent=1 // loop_header_branch
      %12 = sbr.rel (%p10) target = $region8
    $region5: #{linear_pallas.1} parent=1 // loop_body
      %s14 = ssub.s32 %s9, 1
      %s15 = ssub.s32 %s9, 2
      %s16 = sadd.s32 %s9, 1
      %s17 = ssub.s32 %s9, %s16
      %p18 = scmp.eq.s32.totalorder %s17, 0
      %s20 = sadd.s32 %s19, 1
      %s21 = scalar_select %p18, %s19, %s20
      %p24 = pneg %p18
      %p25 = scmp.eq.s32.totalorder %s9, 1
      %p26 = por %p24, %p25
      %p27 = scmp.ne.s32.totalorder %s19, %s22
      %p28 = scmp.eq.s32.totalorder %s9, 0
      %p29 = por %p27, %p28
      %p30 = scmp.ne.s32.totalorder %s19, %s22
      %p31 = scmp.eq.s32.totalorder %s14, 1
      %p32 = por %p30, %p31
      %p33 = scmp.ne.s32.totalorder %s22, %s23
      %p34 = scmp.eq.s32.totalorder %s14, 0
      %p35 = por %p33, %p34
      %p36 = scmp.ne.s32.totalorder %s22, %s23
      %p37 = scmp.eq.s32.totalorder %s15, 1
      %p38 = por %p36, %p37
      %p40 = scmp.ne.s32.totalorder %s23, %s39
      %p41 = scmp.eq.s32.totalorder %s15, 0
      %p42 = por %p40, %p41
      %s44 = sadd.s32 %s43, 1
      %p47 = scmp.eq.s32.totalorder %s9, 1
      %p48 = scmp.ne.s32.totalorder %s43, %s45
      %p49 = scmp.eq.s32.totalorder %s9, 0
      %p50 = por %p48, %p49
      %p51 = scmp.ne.s32.totalorder %s43, %s45
      %p52 = scmp.eq.s32.totalorder %s14, 1
      %p53 = por %p51, %p52
      %p54 = scmp.ne.s32.totalorder %s45, %s46
      %p55 = scmp.eq.s32.totalorder %s14, 0
      %p56 = por %p54, %p55
      %p57 = scmp.ne.s32.totalorder %s45, %s46
      %p58 = scmp.eq.s32.totalorder %s15, 1
      %p59 = por %p57, %p58
      %p61 = scmp.ne.s32.totalorder %s46, %s60
      %p62 = scmp.eq.s32.totalorder %s15, 0
      %p63 = por %p61, %p62
      %s65 = sadd.s32 %s64, 1
      %p68 = scmp.eq.s32.totalorder %s9, 1
      %p69 = scmp.ne.s32.totalorder %s64, %s66
      %p70 = scmp.eq.s32.totalorder %s9, 0
      %p71 = por %p69, %p70
      %p72 = scmp.ne.s32.totalorder %s64, %s66
      %p73 = scmp.eq.s32.totalorder %s14, 1
      %p74 = por %p72, %p73
      %p75 = scmp.ne.s32.totalorder %s66, %s67
      %p76 = scmp.eq.s32.totalorder %s14, 0
      %p77 = por %p75, %p76
      %p78 = scmp.ne.s32.totalorder %s66, %s67
      %p79 = scmp.eq.s32.totalorder %s15, 1
      %p80 = por %p78, %p79
      %p82 = scmp.ne.s32.totalorder %s67, %s81
      %p83 = scmp.eq.s32.totalorder %s15, 0
      %p84 = por %p82, %p83
      %s85 = ssub.s32 %s9, %s16
      %p86 = scmp.eq.s32.totalorder %s85, 0
      %s88 = sadd.s32 %s87, 1
      %s89 = scalar_select %p86, %s87, %s88
      %p92 = pneg %p86
      %p93 = scmp.eq.s32.totalorder %s9, 1
      %p94 = por %p92, %p93
      %p95 = scmp.ne.s32.totalorder %s87, %s90
      %p96 = scmp.eq.s32.totalorder %s9, 0
      %p97 = por %p95, %p96
      %p98 = scmp.ne.s32.totalorder %s87, %s90
      %p99 = scmp.eq.s32.totalorder %s14, 1
      %p100 = por %p98, %p99
      %p101 = scmp.ne.s32.totalorder %s90, %s91
      %p102 = scmp.eq.s32.totalorder %s14, 0
      %p103 = por %p101, %p102
      %p104 = scmp.ne.s32.totalorder %s90, %s91
      %p105 = scmp.eq.s32.totalorder %s15, 1
      %p106 = por %p104, %p105
      %p108 = scmp.ne.s32.totalorder %s91, %s107
      %p109 = scmp.eq.s32.totalorder %s15, 0
      %p110 = por %p108, %p109
      %p111 = scmp.le.s32.totalorder 1, %s9
      %p112 = scmp.lt.s32.totalorder %s9, 3
      %p113 = pnand %p111, %p112
      %p114 = pneg %p113
      // Predicated region
      $region9: #{linear_pallas.1} parent=5 // pred_check
        _
      $region10: #{linear_pallas.1} parent=5 // pred_check_branch
        %116 = sbr.rel (%p113) target = $region12
      $region11: #{linear_pallas.1} parent=5 // pred_region
        %s117 = ssub.s32 %s9, 1
        // Predicated region
        $region13: #{linear_pallas.1} parent=11 // pred_check
          %p118 = pneg %p56
        $region14: #{linear_pallas.1} parent=11 // pred_check_branch
          %120 = sbr.rel (%p118) target = $region16
        $region15: #{linear_pallas.1} parent=11 // pred_region
          _
        $region16: #{linear_pallas.1} parent=11 // pred_fallthru
          _
        // Predicated region
        $region17: #{linear_pallas.1} parent=11 // pred_check
          %p121 = pneg %p77
        $region18: #{linear_pallas.1} parent=11 // pred_check_branch
          %123 = sbr.rel (%p121) target = $region20
        $region19: #{linear_pallas.1} parent=11 // pred_region
          _
        $region20: #{linear_pallas.1} parent=11 // pred_fallthru
          _
      $region12: #{linear_pallas.1} parent=5 // pred_fallthru
        _
      %p124 = scmp.lt.s32.totalorder %s9, 2
      // Predicated region
      $region21: #{linear_pallas.1} parent=5 // pred_check
        %p125 = pneg %p124
      $region22: #{linear_pallas.1} parent=5 // pred_check_branch
        %127 = sbr.rel (%p125) target = $region24
      $region23: #{linear_pallas.1} parent=5 // pred_region
        // Predicated region
        $region25: #{linear_pallas.1} parent=23 // pred_check
          %p128 = pneg %p29
        $region26: #{linear_pallas.1} parent=23 // pred_check_branch
          %130 = sbr.rel (%p128) target = $region28
        $region27: #{linear_pallas.1} parent=23 // pred_region
          %s131 = smul.u32 39, %s9
          %s132 = ssub.s32 77, %s131
          %p133 = scmp.lt.s32.totalorder %s132, 39
          %s134 = scalar_select %p133, %s132, 39
          %s135 = smul.u32 64, %s134
          %p136 = scmp.lt.s32.totalorder %s131, 76
          %s137 = scalar_select %p136, %s131, 76
          %s138 = smul.addr %s137, 4
          %s139 = scalar_lea.vmem %s0, %s138
          %s140 = smul.u32 39, %s9
          %s141 = ssub.s32 77, %s140
          %p142 = scmp.lt.s32.totalorder %s141, 39
          %s143 = scalar_select %p142, %s141, 39
          %s144 = smul.u32 64, %s143
        $region28: #{linear_pallas.1} parent=23 // pred_fallthru
          _
      $region24: #{linear_pallas.1} parent=5 // pred_fallthru
        _
      %p145 = scmp.le.s32.totalorder 1, %s9
      %p146 = scmp.lt.s32.totalorder %s9, 3
      %p147 = pnand %p145, %p146
      %p148 = pneg %p147
      // Predicated region
      $region29: #{linear_pallas.1} parent=5 // pred_check
        _
      $region30: #{linear_pallas.1} parent=5 // pred_check_branch
        %150 = sbr.rel (%p147) target = $region32
      $region31: #{linear_pallas.1} parent=5 // pred_region
        %s151 = ssub.s32 %s9, 1
        %s152 = smul.u32 39, %s14
        %s153 = ssub.s32 77, %s152
        %p154 = scmp.lt.s32.totalorder %s153, 39
        %s155 = scalar_select %p154, %s153, 39
        %s156 = smul.u32 64, %s155
        %p157 = scmp.lt.s32.totalorder %s152, 76
        %s158 = scalar_select %p157, %s152, 76
        %s159 = smul.addr %s158, 4
        %s160 = scalar_lea.vmem %s0, %s159
        %p161 = pneg %p35
        %p162 = pneg %p32
        %p163 = pneg %p56
        %p164 = pneg %p53
        %p165 = pneg %p77
        %p166 = pneg %p74
        %p167 = pneg %p103
        %p168 = pneg %p100
        %s169 = sand.u32 %s90, 1
        %s170 = sand.u32 %s90, 1
        %s171 = smul.addr %s170, 312
        %s172 = scalar_lea.vmem [#allocation2], %s171
        %s173 = smul.u32 39, %s14
        %s174 = ssub.s32 77, %s173
        %p175 = scmp.lt.s32.totalorder %s174, 39
        %s176 = scalar_select %p175, %s174, 39
        %s177 = smul.u32 64, %s176
        %p178 = scmp.lt.s32.totalorder %s173, 76
        %s179 = scalar_select %p178, %s173, 76
        %s180 = smul.addr %s179, 4
        %s181 = scalar_lea.vmem %s0, %s180
        %s182 = smul.u32 39, %s14
        %s183 = ssub.s32 77, %s182
        %p184 = scmp.lt.s32.totalorder %s183, 39
        %s185 = scalar_select %p184, %s183, 39
        %s186 = smul.u32 64, %s185
        %s187 = smul.u32 39, %s14
        %s188 = ssub.s32 77, %s187
        %p189 = scmp.lt.s32.totalorder %s188, 39
        %s190 = scalar_select %p189, %s188, 39
        %s191 = smul.u32 128, %s190
        %v193 = vld [vmem:[%s181] sm:$0xf]
        %v194 = vld [vmem:[%s181 + $0x4] sm:$0xf]
        %v195 = vld [vmem:[%s181 + $0x8] sm:$0xf]
        %v196 = vld [vmem:[%s181 + $0xc] sm:$0xf]
        %v197 = vld [vmem:[%s181 + $0x10] sm:$0xf]
        %v198 = vld [vmem:[%s181 + $0x14] sm:$0xf]
        %v199 = vld [vmem:[%s181 + $0x18] sm:$0xf]
        %v200 = vld [vmem:[%s181 + $0x1c] sm:$0xf]
        %v201 = vld [vmem:[%s181 + $0x20] sm:$0xf]
        %v202 = vld [vmem:[%s181 + $0x24] sm:$0xf]
        %v203 = vld [vmem:[%s181 + $0x28] sm:$0xf]
        %v204 = vld [vmem:[%s181 + $0x2c] sm:$0xf]
        %v205 = vld [vmem:[%s181 + $0x30] sm:$0xf]
        %v206 = vld [vmem:[%s181 + $0x34] sm:$0xf]
        %v207 = vld [vmem:[%s181 + $0x38] sm:$0xf]
        %v208 = vld [vmem:[%s181 + $0x3c] sm:$0xf]
        %v209 = vld [vmem:[%s181 + $0x40] sm:$0xf]
        %v210 = vld [vmem:[%s181 + $0x44] sm:$0xf]
        %v211 = vld [vmem:[%s181 + $0x48] sm:$0xf]
        %v212 = vld [vmem:[%s181 + $0x4c] sm:$0xf]
        %v213 = vld [vmem:[%s181 + $0x50] sm:$0xf]
        %v214 = vld [vmem:[%s181 + $0x54] sm:$0xf]
        %v215 = vld [vmem:[%s181 + $0x58] sm:$0xf]
        %v216 = vld [vmem:[%s181 + $0x5c] sm:$0xf]
        %v217 = vld [vmem:[%s181 + $0x60] sm:$0xf]
        %v218 = vld [vmem:[%s181 + $0x64] sm:$0xf]
        %v219 = vld [vmem:[%s181 + $0x68] sm:$0xf]
        %v220 = vld [vmem:[%s181 + $0x6c] sm:$0xf]
        %v221 = vld [vmem:[%s181 + $0x70] sm:$0xf]
        %v222 = vld [vmem:[%s181 + $0x74] sm:$0xf]
        %v223 = vld [vmem:[%s181 + $0x78] sm:$0xf]
        %v224 = vld [vmem:[%s181 + $0x7c] sm:$0xf]
        %v225 = vld [vmem:[%s181 + $0x80] sm:$0xf]
        %v226 = vld [vmem:[%s181 + $0x84] sm:$0xf]
        %v227 = vld [vmem:[%s181 + $0x88] sm:$0xf]
        %v228 = vld [vmem:[%s181 + $0x8c] sm:$0xf]
        %v229 = vld [vmem:[%s181 + $0x90] sm:$0xf]
        %v230 = vld [vmem:[%s181 + $0x94] sm:$0xf]
        %v231 = vld [vmem:[%s181 + $0x98] sm:$0xf]
        %v232 = vld [vmem:[%s1] sm:$0xf]
        %v233 = vld [vmem:[%s1 + $0x4] sm:$0xf]
        %v234 = vld [vmem:[%s1 + $0x8] sm:$0xf]
        %v235 = vld [vmem:[%s1 + $0xc] sm:$0xf]
        %v236 = vld [vmem:[%s1 + $0x10] sm:$0xf]
        %v237 = vld [vmem:[%s1 + $0x14] sm:$0xf]
        %v238 = vld [vmem:[%s1 + $0x18] sm:$0xf]
        %v239 = vld [vmem:[%s1 + $0x1c] sm:$0xf]
        %v240 = vld [vmem:[%s1 + $0x20] sm:$0xf]
        %v241 = vld [vmem:[%s1 + $0x24] sm:$0xf]
        %v242 = vld [vmem:[%s1 + $0x28] sm:$0xf]
        %v243 = vld [vmem:[%s1 + $0x2c] sm:$0xf]
        %v244 = vld [vmem:[%s1 + $0x30] sm:$0xf]
        %v245 = vld [vmem:[%s1 + $0x34] sm:$0xf]
        %v246 = vld [vmem:[%s1 + $0x38] sm:$0xf]
        %v247 = vld [vmem:[%s1 + $0x3c] sm:$0xf]
        %v248 = vld [vmem:[%s2] sm:$0x1]
        %v250 = vlaneseq
        %v251 = vshrl.u32 %v250, 7
        %v252 = vsub.s32 0, %v251
        %v253 = vrot.slane %v248, %v252
        %v294 = vunpack.c.l.b16 %v193
        %v295 = vunpack.c.l.b16 %v194
        %v296 = vunpack.c.l.b16 %v195
        %v297 = vunpack.c.l.b16 %v196
        %v298 = vunpack.c.l.b16 %v197
        %v299 = vunpack.c.l.b16 %v198
        %v300 = vunpack.c.l.b16 %v199
        %v301 = vunpack.c.l.b16 %v200
        %v302 = vunpack.c.l.b16 %v201
        %v303 = vunpack.c.l.b16 %v202
        %v304 = vunpack.c.l.b16 %v203
        %v305 = vunpack.c.l.b16 %v204
        %v306 = vunpack.c.l.b16 %v205
        %v307 = vunpack.c.l.b16 %v206
        %v308 = vunpack.c.l.b16 %v207
        %v309 = vunpack.c.l.b16 %v208
        %v310 = vunpack.c.l.b16 %v209
        %v311 = vunpack.c.l.b16 %v210
        %v312 = vunpack.c.l.b16 %v211
        %v313 = vunpack.c.l.b16 %v212
        %v314 = vunpack.c.l.b16 %v213
        %v315 = vunpack.c.l.b16 %v214
        %v316 = vunpack.c.l.b16 %v215
        %v317 = vunpack.c.l.b16 %v216
        %v318 = vunpack.c.l.b16 %v217
        %v319 = vunpack.c.l.b16 %v218
        %v320 = vunpack.c.l.b16 %v219
        %v321 = vunpack.c.l.b16 %v220
        %v322 = vunpack.c.l.b16 %v221
        %v323 = vunpack.c.l.b16 %v222
        %v324 = vunpack.c.l.b16 %v223
        %v325 = vunpack.c.l.b16 %v224
        %v326 = vunpack.c.l.b16 %v225
        %v327 = vunpack.c.l.b16 %v226
        %v328 = vunpack.c.l.b16 %v227
        %v329 = vunpack.c.l.b16 %v228
        %v330 = vunpack.c.l.b16 %v229
        %v331 = vunpack.c.l.b16 %v230
        %v332 = vunpack.c.l.b16 %v231
        %v333 = vpack.c.b16 %v295, %v294
        %v334 = vpack.c.b16 %v297, %v296
        %v335 = vpack.c.b16 %v299, %v298
        %v336 = vpack.c.b16 %v301, %v300
        %v337 = vpack.c.b16 %v303, %v302
        %v338 = vpack.c.b16 %v305, %v304
        %v339 = vpack.c.b16 %v307, %v306
        %v340 = vpack.c.b16 %v309, %v308
        %v341 = vpack.c.b16 %v311, %v310
        %v342 = vpack.c.b16 %v313, %v312
        %v343 = vpack.c.b16 %v315, %v314
        %v344 = vpack.c.b16 %v317, %v316
        %v345 = vpack.c.b16 %v319, %v318
        %v346 = vpack.c.b16 %v321, %v320
        %v347 = vpack.c.b16 %v323, %v322
        %v348 = vpack.c.b16 %v325, %v324
        %v349 = vpack.c.b16 %v327, %v326
        %v350 = vpack.c.b16 %v329, %v328
        %v351 = vpack.c.b16 %v331, %v330
        %v352 = vpack.c.b16 %v332, %v332
        %v389 = vunpack.c.l.b16 %v232
        %v390 = vunpack.c.l.b16 %v233
        %v391 = vunpack.c.l.b16 %v234
        %v392 = vunpack.c.l.b16 %v235
        %v393 = vunpack.c.l.b16 %v236
        %v394 = vunpack.c.l.b16 %v237
        %v395 = vunpack.c.l.b16 %v238
        %v396 = vunpack.c.l.b16 %v239
        %v397 = vunpack.c.l.b16 %v240
        %v398 = vunpack.c.l.b16 %v241
        %v399 = vunpack.c.l.b16 %v242
        %v400 = vunpack.c.l.b16 %v243
        %v401 = vunpack.c.l.b16 %v244
        %v402 = vunpack.c.l.b16 %v245
        %v403 = vunpack.c.l.b16 %v246
        %v404 = vunpack.c.l.b16 %v247
        %v405 = vpack.c.b16 %v390, %v389
        %v406 = vpack.c.b16 %v392, %v391
        %v407 = vpack.c.b16 %v394, %v393
        %v408 = vpack.c.b16 %v396, %v395
        %v409 = vpack.c.b16 %v398, %v397
        %v410 = vpack.c.b16 %v400, %v399
        %v411 = vpack.c.b16 %v402, %v401
        %v412 = vpack.c.b16 %v404, %v403
        %421 = vmatprep.subr.bf16.mxu0 0
        %422 = vmatpush1.bf16.msra.mxu0 %v405
        %423 = vmatprep.subr.bf16.mxu0 0
        %424 = vmatpush1.bf16.msra.mxu0 %v406
        %425 = vmatprep.subr.bf16.mxu0 0
        %426 = vmatpush1.bf16.msra.mxu0 %v407
        %427 = vmatprep.subr.bf16.mxu0 0
        %428 = vmatpush1.bf16.msra.mxu0 %v408
        %429 = vmatprep.subr.bf16.mxu0 0
        %430 = vmatpush1.bf16.msra.mxu0 %v409
        %431 = vmatprep.subr.bf16.mxu0 0
        %432 = vmatpush1.bf16.msra.mxu0 %v410
        %433 = vmatprep.subr.bf16.mxu0 0
        %434 = vmatpush1.bf16.msra.mxu0 %v411
        %435 = vmatprep.subr.bf16.mxu0 0
        %436 = vmatpush1.bf16.msra.mxu0 %v412
        %437 = vmatprep.subr.bf16.mxu0 0
        %438 = vmatpush1.bf16.msra.mxu0 0
        %439 = vmatprep.subr.bf16.mxu0 0
        %440 = vmatpush1.bf16.msra.mxu0 0
        %441 = vmatprep.subr.bf16.mxu0 0
        %442 = vmatpush1.bf16.msra.mxu0 0
        %443 = vmatprep.subr.bf16.mxu0 0
        %444 = vmatpush1.bf16.msra.mxu0 0
        %445 = vmatprep.subr.bf16.mxu0 0
        %446 = vmatpush1.bf16.msra.mxu0 0
        %447 = vmatprep.subr.bf16.mxu0 0
        %448 = vmatpush1.bf16.msra.mxu0 0
        %449 = vmatprep.subr.bf16.mxu0 0
        %450 = vmatpush1.bf16.msra.mxu0 0
        %451 = vmatprep.subr.bf16.mxu0 0
        %452 = vmatpush1.bf16.msra.mxu0 0
        %453 = vmatprep.mubr.bf16.mxu0 0
        %454 = vmatmul.mubr.bf16.gmra.mrb[0].mxu0 %v333
        %v455 = vpop.f32.mrb[0].mxu0
        %v456 = vadd.f32 %v253, %v455
        %v457 = vpop.f32.mrb[0].mxu0
        %v458 = vpop.f32.mrb[0].mxu0
        %v459 = vadd.f32 %v253, %v458
        %v460 = vpop.f32.mrb[0].mxu0
        %461 = vmatprep.mubr.bf16.mxu0 0
        %462 = vmatmul.mubr.bf16.gmra.mrb[0].mxu0 %v334
        %v463 = vpop.f32.mrb[0].mxu0
        %v464 = vadd.f32 %v253, %v463
        %v465 = vpop.f32.mrb[0].mxu0
        %v466 = vpop.f32.mrb[0].mxu0
        %v467 = vadd.f32 %v253, %v466
        %v468 = vpop.f32.mrb[0].mxu0
        %469 = vmatprep.mubr.bf16.mxu0 0
        %470 = vmatmul.mubr.bf16.gmra.mrb[0].mxu0 %v335
        %v471 = vpop.f32.mrb[0].mxu0
        %v472 = vadd.f32 %v253, %v471
        %v473 = vpop.f32.mrb[0].mxu0
        %v474 = vpop.f32.mrb[0].mxu0
        %v475 = vadd.f32 %v253, %v474
        %v476 = vpop.f32.mrb[0].mxu0
        %477 = vmatprep.mubr.bf16.mxu0 0
        %478 = vmatmul.mubr.bf16.gmra.mrb[0].mxu0 %v336
        %v479 = vpop.f32.mrb[0].mxu0
        %v480 = vadd.f32 %v253, %v479
        %v481 = vpop.f32.mrb[0].mxu0
        %v482 = vpop.f32.mrb[0].mxu0
        %v483 = vadd.f32 %v253, %v482
        %v484 = vpop.f32.mrb[0].mxu0
        %485 = vmatprep.mubr.bf16.mxu0 0
        %486 = vmatmul.mubr.bf16.gmra.mrb[0].mxu0 %v337
        %v487 = vpop.f32.mrb[0].mxu0
        %v488 = vadd.f32 %v253, %v487
        %v489 = vpop.f32.mrb[0].mxu0
        %v490 = vpop.f32.mrb[0].mxu0
        %v491 = vadd.f32 %v253, %v490
        %v492 = vpop.f32.mrb[0].mxu0
        %493 = vmatprep.mubr.bf16.mxu0 0
        %494 = vmatmul.mubr.bf16.gmra.mrb[0].mxu0 %v338
        %v495 = vpop.f32.mrb[0].mxu0
        %v496 = vadd.f32 %v253, %v495
        %v497 = vpop.f32.mrb[0].mxu0
        %v498 = vpop.f32.mrb[0].mxu0
        %v499 = vadd.f32 %v253, %v498
        %v500 = vpop.f32.mrb[0].mxu0
        %501 = vmatprep.mubr.bf16.mxu0 0
        %502 = vmatmul.mubr.bf16.gmra.mrb[0].mxu0 %v339
        %v503 = vpop.f32.mrb[0].mxu0
        %v504 = vadd.f32 %v253, %v503
        %v505 = vpop.f32.mrb[0].mxu0
        %v506 = vpop.f32.mrb[0].mxu0
        %v507 = vadd.f32 %v253, %v506
        %v508 = vpop.f32.mrb[0].mxu0
        %509 = vmatprep.mubr.bf16.mxu0 0
        %510 = vmatmul.mubr.bf16.gmra.mrb[0].mxu0 %v340
        %v511 = vpop.f32.mrb[0].mxu0
        %v512 = vadd.f32 %v253, %v511
        %v513 = vpop.f32.mrb[0].mxu0
        %v514 = vpop.f32.mrb[0].mxu0
        %v515 = vadd.f32 %v253, %v514
        %v516 = vpop.f32.mrb[0].mxu0
        %517 = vmatprep.mubr.bf16.mxu0 0
        %518 = vmatmul.mubr.bf16.gmra.mrb[0].mxu0 %v341
        %v519 = vpop.f32.mrb[0].mxu0
        %v520 = vadd.f32 %v253, %v519
        %v521 = vpop.f32.mrb[0].mxu0
        %v522 = vpop.f32.mrb[0].mxu0
        %v523 = vadd.f32 %v253, %v522
        %v524 = vpop.f32.mrb[0].mxu0
        %525 = vmatprep.mubr.bf16.mxu0 0
        %526 = vmatmul.mubr.bf16.gmra.mrb[0].mxu0 %v342
        %v527 = vpop.f32.mrb[0].mxu0
        %v528 = vadd.f32 %v253, %v527
        %v529 = vpop.f32.mrb[0].mxu0
        %v530 = vpop.f32.mrb[0].mxu0
        %v531 = vadd.f32 %v253, %v530
        %v532 = vpop.f32.mrb[0].mxu0
        %533 = vmatprep.mubr.bf16.mxu0 0
        %534 = vmatmul.mubr.bf16.gmra.mrb[0].mxu0 %v343
        %v535 = vpop.f32.mrb[0].mxu0
        %v536 = vadd.f32 %v253, %v535
        %v537 = vpop.f32.mrb[0].mxu0
        %v538 = vpop.f32.mrb[0].mxu0
        %v539 = vadd.f32 %v253, %v538
        %v540 = vpop.f32.mrb[0].mxu0
        %541 = vmatprep.mubr.bf16.mxu0 0
        %542 = vmatmul.mubr.bf16.gmra.mrb[0].mxu0 %v344
        %v543 = vpop.f32.mrb[0].mxu0
        %v544 = vadd.f32 %v253, %v543
        %v545 = vpop.f32.mrb[0].mxu0
        %v546 = vpop.f32.mrb[0].mxu0
        %v547 = vadd.f32 %v253, %v546
        %v548 = vpop.f32.mrb[0].mxu0
        %549 = vmatprep.mubr.bf16.mxu0 0
        %550 = vmatmul.mubr.bf16.gmra.mrb[0].mxu0 %v345
        %v551 = vpop.f32.mrb[0].mxu0
        %v552 = vadd.f32 %v253, %v551
        %v553 = vpop.f32.mrb[0].mxu0
        %v554 = vpop.f32.mrb[0].mxu0
        %v555 = vadd.f32 %v253, %v554
        %v556 = vpop.f32.mrb[0].mxu0
        %557 = vmatprep.mubr.bf16.mxu0 0
        %558 = vmatmul.mubr.bf16.gmra.mrb[0].mxu0 %v346
        %v559 = vpop.f32.mrb[0].mxu0
        %v560 = vadd.f32 %v253, %v559
        %v561 = vpop.f32.mrb[0].mxu0
        %v562 = vpop.f32.mrb[0].mxu0
        %v563 = vadd.f32 %v253, %v562
        %v564 = vpop.f32.mrb[0].mxu0
        %565 = vmatprep.mubr.bf16.mxu0 0
        %566 = vmatmul.mubr.bf16.gmra.mrb[0].mxu0 %v347
        %v567 = vpop.f32.mrb[0].mxu0
        %v568 = vadd.f32 %v253, %v567
        %v569 = vpop.f32.mrb[0].mxu0
        %v570 = vpop.f32.mrb[0].mxu0
        %v571 = vadd.f32 %v253, %v570
        %v572 = vpop.f32.mrb[0].mxu0
        %573 = vmatprep.mubr.bf16.mxu0 0
        %574 = vmatmul.mubr.bf16.gmra.mrb[0].mxu0 %v348
        %v575 = vpop.f32.mrb[0].mxu0
        %v576 = vadd.f32 %v253, %v575
        %v577 = vpop.f32.mrb[0].mxu0
        %v578 = vpop.f32.mrb[0].mxu0
        %v579 = vadd.f32 %v253, %v578
        %v580 = vpop.f32.mrb[0].mxu0
        %581 = vmatprep.mubr.bf16.mxu0 0
        %582 = vmatmul.mubr.bf16.gmra.mrb[0].mxu0 %v349
        %v583 = vpop.f32.mrb[0].mxu0
        %v584 = vadd.f32 %v253, %v583
        %v585 = vpop.f32.mrb[0].mxu0
        %v586 = vpop.f32.mrb[0].mxu0
        %v587 = vadd.f32 %v253, %v586
        %v588 = vpop.f32.mrb[0].mxu0
        %589 = vmatprep.mubr.bf16.mxu0 0
        %590 = vmatmul.mubr.bf16.gmra.mrb[0].mxu0 %v350
        %v591 = vpop.f32.mrb[0].mxu0
        %v592 = vadd.f32 %v253, %v591
        %v593 = vpop.f32.mrb[0].mxu0
        %v594 = vpop.f32.mrb[0].mxu0
        %v595 = vadd.f32 %v253, %v594
        %v596 = vpop.f32.mrb[0].mxu0
        %597 = vmatprep.mubr.bf16.mxu0 0
        %598 = vmatmul.mubr.bf16.gmra.mrb[0].mxu0 %v351
        %v599 = vpop.f32.mrb[0].mxu0
        %v600 = vadd.f32 %v253, %v599
        %v601 = vpop.f32.mrb[0].mxu0
        %v602 = vpop.f32.mrb[0].mxu0
        %v603 = vadd.f32 %v253, %v602
        %v604 = vpop.f32.mrb[0].mxu0
        %605 = vmatprep.mubr.bf16.mxu0 0
        %606 = vmatmul.mubr.bf16.gmra.mrb[0].mxu0 %v352
        %v607 = vpop.f32.mrb[0].mxu0
        %v608 = vadd.f32 %v253, %v607
        %v609 = vpop.f32.mrb[0].mxu0
        %v610 = vpop.f32.mrb[0].mxu0
        %v611 = vpop.f32.mrb[0].mxu0
        %612 = vdwg.mxu0
        %vm613 = vcmask 261120
        %614 = vst.msk [vmem:[%s172] sm:$0xff] %vm613, %v456
        %615 = vst.msk [vmem:[%s172 + $0x8] sm:$0xff] %vm613, %v459
        %616 = vst.msk [vmem:[%s172 + $0x10] sm:$0xff] %vm613, %v464
        %617 = vst.msk [vmem:[%s172 + $0x18] sm:$0xff] %vm613, %v467
        %618 = vst.msk [vmem:[%s172 + $0x20] sm:$0xff] %vm613, %v472
        %619 = vst.msk [vmem:[%s172 + $0x28] sm:$0xff] %vm613, %v475
        %620 = vst.msk [vmem:[%s172 + $0x30] sm:$0xff] %vm613, %v480
        %621 = vst.msk [vmem:[%s172 + $0x38] sm:$0xff] %vm613, %v483
        %622 = vst.msk [vmem:[%s172 + $0x40] sm:$0xff] %vm613, %v488
        %623 = vst.msk [vmem:[%s172 + $0x48] sm:$0xff] %vm613, %v491
        %624 = vst.msk [vmem:[%s172 + $0x50] sm:$0xff] %vm613, %v496
        %625 = vst.msk [vmem:[%s172 + $0x58] sm:$0xff] %vm613, %v499
        %626 = vst.msk [vmem:[%s172 + $0x60] sm:$0xff] %vm613, %v504
        %627 = vst.msk [vmem:[%s172 + $0x68] sm:$0xff] %vm613, %v507
        %628 = vst.msk [vmem:[%s172 + $0x70] sm:$0xff] %vm613, %v512
        %629 = vst.msk [vmem:[%s172 + $0x78] sm:$0xff] %vm613, %v515
        %630 = vst.msk [vmem:[%s172 + $0x80] sm:$0xff] %vm613, %v520
        %631 = vst.msk [vmem:[%s172 + $0x88] sm:$0xff] %vm613, %v523
        %632 = vst.msk [vmem:[%s172 + $0x90] sm:$0xff] %vm613, %v528
        %633 = vst.msk [vmem:[%s172 + $0x98] sm:$0xff] %vm613, %v531
        %634 = vst.msk [vmem:[%s172 + $0xa0] sm:$0xff] %vm613, %v536
        %635 = vst.msk [vmem:[%s172 + $0xa8] sm:$0xff] %vm613, %v539
        %636 = vst.msk [vmem:[%s172 + $0xb0] sm:$0xff] %vm613, %v544
        %637 = vst.msk [vmem:[%s172 + $0xb8] sm:$0xff] %vm613, %v547
        %638 = vst.msk [vmem:[%s172 + $0xc0] sm:$0xff] %vm613, %v552
        %639 = vst.msk [vmem:[%s172 + $0xc8] sm:$0xff] %vm613, %v555
        %640 = vst.msk [vmem:[%s172 + $0xd0] sm:$0xff] %vm613, %v560
        %641 = vst.msk [vmem:[%s172 + $0xd8] sm:$0xff] %vm613, %v563
        %642 = vst.msk [vmem:[%s172 + $0xe0] sm:$0xff] %vm613, %v568
        %643 = vst.msk [vmem:[%s172 + $0xe8] sm:$0xff] %vm613, %v571
        %644 = vst.msk [vmem:[%s172 + $0xf0] sm:$0xff] %vm613, %v576
        %645 = vst.msk [vmem:[%s172 + $0xf8] sm:$0xff] %vm613, %v579
        %646 = vst.msk [vmem:[%s172 + $0x100] sm:$0xff] %vm613, %v584
        %647 = vst.msk [vmem:[%s172 + $0x108] sm:$0xff] %vm613, %v587
        %648 = vst.msk [vmem:[%s172 + $0x110] sm:$0xff] %vm613, %v592
        %649 = vst.msk [vmem:[%s172 + $0x118] sm:$0xff] %vm613, %v595
        %650 = vst.msk [vmem:[%s172 + $0x120] sm:$0xff] %vm613, %v600
        %651 = vst.msk [vmem:[%s172 + $0x128] sm:$0xff] %vm613, %v603
        %652 = vst.msk [vmem:[%s172 + $0x130] sm:$0xff] %vm613, %v608
        %s653 = sand.u32 %s90, 1
        %s654 = sand.u32 %s90, 1
        %s655 = smul.addr %s654, 312
        %s656 = scalar_lea.vmem [#allocation2], %s655
        // Predicated region
        $region33: #{linear_pallas.1} parent=31 // pred_check
          %p657 = pneg %p100
        $region34: #{linear_pallas.1} parent=31 // pred_check_branch
          %659 = sbr.rel (%p657) target = $region36
        $region35: #{linear_pallas.1} parent=31 // pred_region
          %s660 = smul.u32 39, %s14
          %s661 = ssub.s32 77, %s660
          %p662 = scmp.lt.s32.totalorder %s661, 39
          %s663 = scalar_select %p662, %s661, 39
          %s664 = smul.u32 128, %s663
          %p665 = scmp.ne.s32.totalorder 0, %s664
          %s666 = smul.addr %s660, 8
          %s667 = scalar_lea.vmem %s3, %s666
          // Predicated region
          $region37: #{linear_pallas.1} parent=35 // pred_check
            %p668 = pneg %p665
          $region38: #{linear_pallas.1} parent=35 // pred_check_branch
            %670 = sbr.rel (%p668) target = $region40
          $region39: #{linear_pallas.1} parent=35 // pred_region
            // Predicated region
            $region41: #{linear_pallas.1} parent=39 // pred_check
              _
            $region42: #{linear_pallas.1} parent=39 // pred_check_branch
              %672 = sbr.rel (0) target = $region44
            $region43: #{linear_pallas.1} parent=39 // pred_region
              // Predicated region
              $region63: #{linear_pallas.1} parent=43 // pred_check
                _
              $region64: #{linear_pallas.1} parent=43 // pred_check_branch
                %798 = sbr.rel (0) target = $region66
              $region65: #{linear_pallas.1} parent=43 // pred_region
                %s799 = sdiv.u32.pop %s663, 39
                %s800 = srem.u32.pop %s663, 39
                // While loop
                $region67: #{linear_pallas.1} parent=65 // loop_pre_header
                  _
                $region68: #{linear_pallas.1} parent=65 // loop_header
                  %s802 = sphi 0, %s804
                  %p803 = scmp.ge.s32.totalorder %s802, %s799
                  %s807 = sphi 0, %s890
                  %s808 = sphi %s656, %s893
                  %s809 = sphi %s667, %s894
                $region69: #{linear_pallas.1} parent=65 // loop_header_branch
                  %806 = sbr.rel (%p803) target = $region73
                $region70: #{linear_pallas.1} parent=65 // loop_body
                  %v810 = vld [vmem:[%s808] sm:$0xff]
                  %811 = vst [vmem:[%s809] sm:$0xff] %v810
                  %v812 = vld [vmem:[%s808 + $0x8] sm:$0xff]
                  %813 = vst [vmem:[%s809 + $0x8] sm:$0xff] %v812
                  %v814 = vld [vmem:[%s808 + $0x10] sm:$0xff]
                  %815 = vst [vmem:[%s809 + $0x10] sm:$0xff] %v814
                  %v816 = vld [vmem:[%s808 + $0x18] sm:$0xff]
                  %817 = vst [vmem:[%s809 + $0x18] sm:$0xff] %v816
                  %v818 = vld [vmem:[%s808 + $0x20] sm:$0xff]
                  %819 = vst [vmem:[%s809 + $0x20] sm:$0xff] %v818
                  %v820 = vld [vmem:[%s808 + $0x28] sm:$0xff]
                  %821 = vst [vmem:[%s809 + $0x28] sm:$0xff] %v820
                  %v822 = vld [vmem:[%s808 + $0x30] sm:$0xff]
                  %823 = vst [vmem:[%s809 + $0x30] sm:$0xff] %v822
                  %v824 = vld [vmem:[%s808 + $0x38] sm:$0xff]
                  %825 = vst [vmem:[%s809 + $0x38] sm:$0xff] %v824
                  %v826 = vld [vmem:[%s808 + $0x40] sm:$0xff]
                  %827 = vst [vmem:[%s809 + $0x40] sm:$0xff] %v826
                  %v828 = vld [vmem:[%s808 + $0x48] sm:$0xff]
                  %829 = vst [vmem:[%s809 + $0x48] sm:$0xff] %v828
                  %v830 = vld [vmem:[%s808 + $0x50] sm:$0xff]
                  %831 = vst [vmem:[%s809 + $0x50] sm:$0xff] %v830
                  %v832 = vld [vmem:[%s808 + $0x58] sm:$0xff]
                  %833 = vst [vmem:[%s809 + $0x58] sm:$0xff] %v832
                  %v834 = vld [vmem:[%s808 + $0x60] sm:$0xff]
                  %835 = vst [vmem:[%s809 + $0x60] sm:$0xff] %v834
                  %v836 = vld [vmem:[%s808 + $0x68] sm:$0xff]
                  %837 = vst [vmem:[%s809 + $0x68] sm:$0xff] %v836
                  %v838 = vld [vmem:[%s808 + $0x70] sm:$0xff]
                  %839 = vst [vmem:[%s809 + $0x70] sm:$0xff] %v838
                  %v840 = vld [vmem:[%s808 + $0x78] sm:$0xff]
                  %841 = vst [vmem:[%s809 + $0x78] sm:$0xff] %v840
                  %v842 = vld [vmem:[%s808 + $0x80] sm:$0xff]
                  %843 = vst [vmem:[%s809 + $0x80] sm:$0xff] %v842
                  %v844 = vld [vmem:[%s808 + $0x88] sm:$0xff]
                  %845 = vst [vmem:[%s809 + $0x88] sm:$0xff] %v844
                  %v846 = vld [vmem:[%s808 + $0x90] sm:$0xff]
                  %847 = vst [vmem:[%s809 + $0x90] sm:$0xff] %v846
                  %v848 = vld [vmem:[%s808 + $0x98] sm:$0xff]
                  %849 = vst [vmem:[%s809 + $0x98] sm:$0xff] %v848
                  %v850 = vld [vmem:[%s808 + $0xa0] sm:$0xff]
                  %851 = vst [vmem:[%s809 + $0xa0] sm:$0xff] %v850
                  %v852 = vld [vmem:[%s808 + $0xa8] sm:$0xff]
                  %853 = vst [vmem:[%s809 + $0xa8] sm:$0xff] %v852
                  %v854 = vld [vmem:[%s808 + $0xb0] sm:$0xff]
                  %855 = vst [vmem:[%s809 + $0xb0] sm:$0xff] %v854
                  %v856 = vld [vmem:[%s808 + $0xb8] sm:$0xff]
                  %857 = vst [vmem:[%s809 + $0xb8] sm:$0xff] %v856
                  %v858 = vld [vmem:[%s808 + $0xc0] sm:$0xff]
                  %859 = vst [vmem:[%s809 + $0xc0] sm:$0xff] %v858
                  %v860 = vld [vmem:[%s808 + $0xc8] sm:$0xff]
                  %861 = vst [vmem:[%s809 + $0xc8] sm:$0xff] %v860
                  %v862 = vld [vmem:[%s808 + $0xd0] sm:$0xff]
                  %863 = vst [vmem:[%s809 + $0xd0] sm:$0xff] %v862
                  %v864 = vld [vmem:[%s808 + $0xd8] sm:$0xff]
                  %865 = vst [vmem:[%s809 + $0xd8] sm:$0xff] %v864
                  %v866 = vld [vmem:[%s808 + $0xe0] sm:$0xff]
                  %867 = vst [vmem:[%s809 + $0xe0] sm:$0xff] %v866
                  %v868 = vld [vmem:[%s808 + $0xe8] sm:$0xff]
                  %869 = vst [vmem:[%s809 + $0xe8] sm:$0xff] %v868
                  %v870 = vld [vmem:[%s808 + $0xf0] sm:$0xff]
                  %871 = vst [vmem:[%s809 + $0xf0] sm:$0xff] %v870
                  %v872 = vld [vmem:[%s808 + $0xf8] sm:$0xff]
                  %873 = vst [vmem:[%s809 + $0xf8] sm:$0xff] %v872
                  %v874 = vld [vmem:[%s808 + $0x100] sm:$0xff]
                  %875 = vst [vmem:[%s809 + $0x100] sm:$0xff] %v874
                  %v876 = vld [vmem:[%s808 + $0x108] sm:$0xff]
                  %877 = vst [vmem:[%s809 + $0x108] sm:$0xff] %v876
                  %v878 = vld [vmem:[%s808 + $0x110] sm:$0xff]
                  %879 = vst [vmem:[%s809 + $0x110] sm:$0xff] %v878
                  %v880 = vld [vmem:[%s808 + $0x118] sm:$0xff]
                  %881 = vst [vmem:[%s809 + $0x118] sm:$0xff] %v880
                  %v882 = vld [vmem:[%s808 + $0x120] sm:$0xff]
                  %883 = vst [vmem:[%s809 + $0x120] sm:$0xff] %v882
                  %v884 = vld [vmem:[%s808 + $0x128] sm:$0xff]
                  %885 = vst [vmem:[%s809 + $0x128] sm:$0xff] %v884
                  %v886 = vld [vmem:[%s808 + $0x130] sm:$0xff]
                  %887 = vst [vmem:[%s809 + $0x130] sm:$0xff] %v886
                  %s888 = sadd.s32 1, %s807
                  %p889 = scmp.ge.s32.totalorder %s888, %s799
                  %s890 = scalar_select %p889, 0, %s888
                  %s891 = smul.u32 %s890, 312
                  %s892 = smul.u32 %s890, 312
                  %s893 = scalar_lea.vmem %s656, %s891 [#allocation2]
                  %s894 = scalar_lea.vmem %s667, %s892
                $region71: #{linear_pallas.1} parent=65 // loop_footer
                  %s804 = sadd.s32 %s802, 1
                $region72: #{linear_pallas.1} parent=65 // loop_footer_branch
                  %801 = sbr.rel target = $region68
                $region73: #{linear_pallas.1} parent=65 // loop_exit
                  _
                %s895 = sdiv.u32.pop %s663, 39
                %s896 = srem.u32.pop %s663, 39
                %s897 = smul.u32 %s895, 39
                %s898 = smul.u32 8, %s897
                %s899 = scalar_lea.vmem %s656, %s898 [#allocation2]
                %s900 = smul.u32 8, %s897
                %s901 = scalar_lea.vmem %s667, %s900
                // While loop
                $region74: #{linear_pallas.1} parent=65 // loop_pre_header
                  _
                $region75: #{linear_pallas.1} parent=65 // loop_header
                  %s903 = sphi 0, %s905
                  %p904 = scmp.ge.s32.totalorder %s903, %s896
                  %s908 = sphi 0, %s915
                  %s909 = sphi %s899, %s918
                  %s910 = sphi %s901, %s919
                $region76: #{linear_pallas.1} parent=65 // loop_header_branch
                  %907 = sbr.rel (%p904) target = $region80
                $region77: #{linear_pallas.1} parent=65 // loop_body
                  %v911 = vld [vmem:[%s909] sm:$0xff]
                  %912 = vst [vmem:[%s910] sm:$0xff] %v911
                  %s913 = sadd.s32 1, %s908
                  %p914 = scmp.ge.s32.totalorder %s913, %s896
                  %s915 = scalar_select %p914, 0, %s913
                  %s916 = smul.u32 %s915, 8
                  %s917 = smul.u32 %s915, 8
                  %s918 = scalar_lea.vmem %s899, %s916 [#allocation2]
                  %s919 = scalar_lea.vmem %s901, %s917
                $region78: #{linear_pallas.1} parent=65 // loop_footer
                  %s905 = sadd.s32 %s903, 1
                $region79: #{linear_pallas.1} parent=65 // loop_footer_branch
                  %902 = sbr.rel target = $region75
                $region80: #{linear_pallas.1} parent=65 // loop_exit
                  _
              $region66: #{linear_pallas.1} parent=43 // pred_fallthru
                _
              // Predicated region
              $region81: #{linear_pallas.1} parent=43 // pred_check
                _
              $region82: #{linear_pallas.1} parent=43 // pred_check_branch
                %921 = sbr.rel target = $region84
              $region83: #{linear_pallas.1} parent=43 // pred_region
                _
              $region84: #{linear_pallas.1} parent=43 // pred_fallthru
                _
            $region44: #{linear_pallas.1} parent=39 // pred_fallthru
              _
            // Predicated region
            $region45: #{linear_pallas.1} parent=39 // pred_check
              _
            $region46: #{linear_pallas.1} parent=39 // pred_check_branch
              %674 = sbr.rel target = $region48
            $region47: #{linear_pallas.1} parent=39 // pred_region
              %s676 = sdiv.u32.pop %s663, 39
              %s677 = srem.u32.pop %s663, 39
              // While loop
              $region49: #{linear_pallas.1} parent=47 // loop_pre_header
                _
              $region50: #{linear_pallas.1} parent=47 // loop_header
                %s679 = sphi 0, %s681
                %p680 = scmp.ge.s32.totalorder %s679, %s676
                %s684 = sphi 0, %s767
                %s685 = sphi %s656, %s770
                %s686 = sphi %s667, %s771
              $region51: #{linear_pallas.1} parent=47 // loop_header_branch
                %683 = sbr.rel (%p680) target = $region55
              $region52: #{linear_pallas.1} parent=47 // loop_body
                %v687 = vld [vmem:[%s685] sm:$0xff]
                %688 = vst [vmem:[%s686] sm:$0xff] %v687
                %v689 = vld [vmem:[%s685 + $0x8] sm:$0xff]
                %690 = vst [vmem:[%s686 + $0x8] sm:$0xff] %v689
                %v691 = vld [vmem:[%s685 + $0x10] sm:$0xff]
                %692 = vst [vmem:[%s686 + $0x10] sm:$0xff] %v691
                %v693 = vld [vmem:[%s685 + $0x18] sm:$0xff]
                %694 = vst [vmem:[%s686 + $0x18] sm:$0xff] %v693
                %v695 = vld [vmem:[%s685 + $0x20] sm:$0xff]
                %696 = vst [vmem:[%s686 + $0x20] sm:$0xff] %v695
                %v697 = vld [vmem:[%s685 + $0x28] sm:$0xff]
                %698 = vst [vmem:[%s686 + $0x28] sm:$0xff] %v697
                %v699 = vld [vmem:[%s685 + $0x30] sm:$0xff]
                %700 = vst [vmem:[%s686 + $0x30] sm:$0xff] %v699
                %v701 = vld [vmem:[%s685 + $0x38] sm:$0xff]
                %702 = vst [vmem:[%s686 + $0x38] sm:$0xff] %v701
                %v703 = vld [vmem:[%s685 + $0x40] sm:$0xff]
                %704 = vst [vmem:[%s686 + $0x40] sm:$0xff] %v703
                %v705 = vld [vmem:[%s685 + $0x48] sm:$0xff]
                %706 = vst [vmem:[%s686 + $0x48] sm:$0xff] %v705
                %v707 = vld [vmem:[%s685 + $0x50] sm:$0xff]
                %708 = vst [vmem:[%s686 + $0x50] sm:$0xff] %v707
                %v709 = vld [vmem:[%s685 + $0x58] sm:$0xff]
                %710 = vst [vmem:[%s686 + $0x58] sm:$0xff] %v709
                %v711 = vld [vmem:[%s685 + $0x60] sm:$0xff]
                %712 = vst [vmem:[%s686 + $0x60] sm:$0xff] %v711
                %v713 = vld [vmem:[%s685 + $0x68] sm:$0xff]
                %714 = vst [vmem:[%s686 + $0x68] sm:$0xff] %v713
                %v715 = vld [vmem:[%s685 + $0x70] sm:$0xff]
                %716 = vst [vmem:[%s686 + $0x70] sm:$0xff] %v715
                %v717 = vld [vmem:[%s685 + $0x78] sm:$0xff]
                %718 = vst [vmem:[%s686 + $0x78] sm:$0xff] %v717
                %v719 = vld [vmem:[%s685 + $0x80] sm:$0xff]
                %720 = vst [vmem:[%s686 + $0x80] sm:$0xff] %v719
                %v721 = vld [vmem:[%s685 + $0x88] sm:$0xff]
                %722 = vst [vmem:[%s686 + $0x88] sm:$0xff] %v721
                %v723 = vld [vmem:[%s685 + $0x90] sm:$0xff]
                %724 = vst [vmem:[%s686 + $0x90] sm:$0xff] %v723
                %v725 = vld [vmem:[%s685 + $0x98] sm:$0xff]
                %726 = vst [vmem:[%s686 + $0x98] sm:$0xff] %v725
                %v727 = vld [vmem:[%s685 + $0xa0] sm:$0xff]
                %728 = vst [vmem:[%s686 + $0xa0] sm:$0xff] %v727
                %v729 = vld [vmem:[%s685 + $0xa8] sm:$0xff]
                %730 = vst [vmem:[%s686 + $0xa8] sm:$0xff] %v729
                %v731 = vld [vmem:[%s685 + $0xb0] sm:$0xff]
                %732 = vst [vmem:[%s686 + $0xb0] sm:$0xff] %v731
                %v733 = vld [vmem:[%s685 + $0xb8] sm:$0xff]
                %734 = vst [vmem:[%s686 + $0xb8] sm:$0xff] %v733
                %v735 = vld [vmem:[%s685 + $0xc0] sm:$0xff]
                %736 = vst [vmem:[%s686 + $0xc0] sm:$0xff] %v735
                %v737 = vld [vmem:[%s685 + $0xc8] sm:$0xff]
                %738 = vst [vmem:[%s686 + $0xc8] sm:$0xff] %v737
                %v739 = vld [vmem:[%s685 + $0xd0] sm:$0xff]
                %740 = vst [vmem:[%s686 + $0xd0] sm:$0xff] %v739
                %v741 = vld [vmem:[%s685 + $0xd8] sm:$0xff]
                %742 = vst [vmem:[%s686 + $0xd8] sm:$0xff] %v741
                %v743 = vld [vmem:[%s685 + $0xe0] sm:$0xff]
                %744 = vst [vmem:[%s686 + $0xe0] sm:$0xff] %v743
                %v745 = vld [vmem:[%s685 + $0xe8] sm:$0xff]
                %746 = vst [vmem:[%s686 + $0xe8] sm:$0xff] %v745
                %v747 = vld [vmem:[%s685 + $0xf0] sm:$0xff]
                %748 = vst [vmem:[%s686 + $0xf0] sm:$0xff] %v747
                %v749 = vld [vmem:[%s685 + $0xf8] sm:$0xff]
                %750 = vst [vmem:[%s686 + $0xf8] sm:$0xff] %v749
                %v751 = vld [vmem:[%s685 + $0x100] sm:$0xff]
                %752 = vst [vmem:[%s686 + $0x100] sm:$0xff] %v751
                %v753 = vld [vmem:[%s685 + $0x108] sm:$0xff]
                %754 = vst [vmem:[%s686 + $0x108] sm:$0xff] %v753
                %v755 = vld [vmem:[%s685 + $0x110] sm:$0xff]
                %756 = vst [vmem:[%s686 + $0x110] sm:$0xff] %v755
                %v757 = vld [vmem:[%s685 + $0x118] sm:$0xff]
                %758 = vst [vmem:[%s686 + $0x118] sm:$0xff] %v757
                %v759 = vld [vmem:[%s685 + $0x120] sm:$0xff]
                %760 = vst [vmem:[%s686 + $0x120] sm:$0xff] %v759
                %v761 = vld [vmem:[%s685 + $0x128] sm:$0xff]
                %762 = vst [vmem:[%s686 + $0x128] sm:$0xff] %v761
                %v763 = vld [vmem:[%s685 + $0x130] sm:$0xff]
                %764 = vst [vmem:[%s686 + $0x130] sm:$0xff] %v763
                %s765 = sadd.s32 1, %s684
                %p766 = scmp.ge.s32.totalorder %s765, %s676
                %s767 = scalar_select %p766, 0, %s765
                %s768 = smul.u32 %s767, 312
                %s769 = smul.u32 %s767, 312
                %s770 = scalar_lea.vmem %s656, %s768 [#allocation2]
                %s771 = scalar_lea.vmem %s667, %s769
              $region53: #{linear_pallas.1} parent=47 // loop_footer
                %s681 = sadd.s32 %s679, 1
              $region54: #{linear_pallas.1} parent=47 // loop_footer_branch
                %678 = sbr.rel target = $region50
              $region55: #{linear_pallas.1} parent=47 // loop_exit
                _
              %s772 = sdiv.u32.pop %s663, 39
              %s773 = srem.u32.pop %s663, 39
              %s774 = smul.u32 %s772, 39
              %s775 = smul.u32 8, %s774
              %s776 = scalar_lea.vmem %s656, %s775 [#allocation2]
              %s777 = smul.u32 8, %s774
              %s778 = scalar_lea.vmem %s667, %s777
              // While loop
              $region56: #{linear_pallas.1} parent=47 // loop_pre_header
                _
              $region57: #{linear_pallas.1} parent=47 // loop_header
                %s780 = sphi 0, %s782
                %p781 = scmp.ge.s32.totalorder %s780, %s773
                %s785 = sphi 0, %s792
                %s786 = sphi %s776, %s795
                %s787 = sphi %s778, %s796
              $region58: #{linear_pallas.1} parent=47 // loop_header_branch
                %784 = sbr.rel (%p781) target = $region62
              $region59: #{linear_pallas.1} parent=47 // loop_body
                %v788 = vld [vmem:[%s786] sm:$0xff]
                %789 = vst [vmem:[%s787] sm:$0xff] %v788
                %s790 = sadd.s32 1, %s785
                %p791 = scmp.ge.s32.totalorder %s790, %s773
                %s792 = scalar_select %p791, 0, %s790
                %s793 = smul.u32 %s792, 8
                %s794 = smul.u32 %s792, 8
                %s795 = scalar_lea.vmem %s776, %s793 [#allocation2]
                %s796 = scalar_lea.vmem %s778, %s794
              $region60: #{linear_pallas.1} parent=47 // loop_footer
                %s782 = sadd.s32 %s780, 1
              $region61: #{linear_pallas.1} parent=47 // loop_footer_branch
                %779 = sbr.rel target = $region57
              $region62: #{linear_pallas.1} parent=47 // loop_exit
                _
            $region48: #{linear_pallas.1} parent=39 // pred_fallthru
              _
          $region40: #{linear_pallas.1} parent=35 // pred_fallthru
            _
          %922 = vnop
        $region36: #{linear_pallas.1} parent=31 // pred_fallthru
          _
      $region32: #{linear_pallas.1} parent=5 // pred_fallthru
        _
      %p923 = scmp.le.s32.totalorder 2, %s9
      // Predicated region
      $region85: #{linear_pallas.1} parent=5 // pred_check
        %p924 = pneg %p923
      $region86: #{linear_pallas.1} parent=5 // pred_check_branch
        %926 = sbr.rel (%p924) target = $region88
      $region87: #{linear_pallas.1} parent=5 // pred_region
        %s927 = ssub.s32 %s9, 2
        // Predicated region
        $region89: #{linear_pallas.1} parent=87 // pred_check
          %p928 = pneg %p106
        $region90: #{linear_pallas.1} parent=87 // pred_check_branch
          %930 = sbr.rel (%p928) target = $region92
        $region91: #{linear_pallas.1} parent=87 // pred_region
          %s931 = sand.u32 %s91, 1
          %s932 = sand.u32 %s91, 1
          %s933 = smul.addr %s932, 312
          %s934 = scalar_lea.vmem [#allocation2], %s933
        $region92: #{linear_pallas.1} parent=87 // pred_fallthru
          _
      $region88: #{linear_pallas.1} parent=5 // pred_fallthru
        _
    $region6: #{linear_pallas.1} parent=1 // loop_footer
      %s13 = sadd.s32 1, %s9
    $region7: #{linear_pallas.1} parent=1 // loop_footer_branch
      %8 = sbr.rel target = $region3
    $region8: #{linear_pallas.1} parent=1 // loop_exit
      _

</llo_original>
